<compile_context>
chip_gen: v7x
topology: tpu7x:2x2x1
jax: 0.10.0
libtpu: 0.0.40
codegen_flags: <defaults>
</compile_context>

<pallas_src>
import functools

import jax
import jax.numpy as jnp
from jax.experimental import pallas as pl
from jax.experimental.pallas import tpu as pltpu

_LANE = 128
_SUB = 8
_TARGET_BLOCK_ROWS = 8192           # f32: 4 MiB per input block; bf16: 2 MiB
_VMEM_LIMIT_BYTES = 48 * 1024 * 1024


def _round_up(x, m):
    return ((x + m - 1) // m) * m


def _sublane_tile(dtype):
    # Packed sublane tile: 8 rows for 4-byte, 16 for 2-byte, 32 for 1-byte dtypes.
    itemsize = jnp.dtype(dtype).itemsize
    return _SUB * max(1, 4 // itemsize)


def _num_tensorcores():
    """2 TensorCores per chip only on v7x-class parts; 1 on v5e/v6e (safe default 1)."""
    try:
        kind = jax.devices()[0].device_kind.lower()
    except Exception:
        return 1
    return 2 if "v7" in kind else 1


def _to_lane_major(arr):
    """Flatten row-major to a (rows, 128) lane-dense view (pads only if n % 128 != 0)."""
    flat = arr.reshape(-1)
    n = flat.size
    if n % _LANE != 0:
        # TODO(synk): lane-unaligned tails still need one cheap pad-copy; padded
        # elements are either zero in both operands or masked in-kernel, so they
        # never contribute to the sum.
        flat = jnp.pad(flat, (0, (-n) % _LANE))
    return flat.reshape(flat.size // _LANE, _LANE)


def _mse_kernel(x_ref, t_ref, out_ref, *, block_rows, steps_per_shard, rows_valid):
    """Accumulate a per-shard (8, 128) partial sum of squared differences."""
    p = pl.program_id(0)   # parallel shard index
    k = pl.program_id(1)   # sequential reduction step within the shard

    # Output block (1, 8, 128) is resident across the 'arbitrary' k axis: init once.
    @pl.when(k == 0)
    def _():
        out_ref[...] = jnp.zeros_like(out_ref)

    # Unclamped global block start row (the DMA index_map clamps; masking below uses
    # the unclamped value so fully-overhanging shard steps contribute exactly zero).
    row0 = (p * steps_per_shard + k) * block_rows

    # Cast in-kernel (free VPU op) so bf16/f16 inputs stream from HBM at native width.
    d = x_ref[...].astype(jnp.float32) - t_ref[...].astype(jnp.float32)

    # Hot path: fully-interior block, mask-free -- ~1 sub + 1 mul + 1 add per element.
    # Sublane-aligned fold: (rows,128)->(rows//8,8,128) summed over axis 0 is pure
    # vreg-wide VPU adds (no per-step cross-lane XLU reduce).
    @pl.when(row0 + block_rows <= rows_valid)
    def _():
        out_ref[0] += jnp.sum(
            (d * d).reshape(block_rows // _SUB, _SUB, _LANE), axis=0)

    # Cold path: ragged / overhanging block(s) only. The static row iota is compared
    # against the scalar (rows_valid - row0), so the iota stays a hoisted constant
    # and no per-element int add is needed.
    @pl.when(row0 + block_rows > rows_valid)
    def _():
        valid = rows_valid - row0     # may be <= 0 for clamped duplicate shard steps
        row_iota = jax.lax.broadcasted_iota(jnp.int32, (block_rows, _LANE), 0)
        d2 = jnp.where(row_iota < valid, d * d, jnp.float32(0.0))
        out_ref[0] += jnp.sum(
            d2.reshape(block_rows // _SUB, _SUB, _LANE), axis=0)


def _mse_loss_2d(x2, t2, n):
    """Scalar MSE over n elements given lane-major (rows, 128) views of x and target."""
    rows = x2.shape[0]
    tile = max(_sublane_tile(x2.dtype), _sublane_tile(t2.dtype))

    # Block sizing: multiple of the packed sublane tile; no bigger than needed for
    # small inputs.
    block_rows = min(_round_up(_TARGET_BLOCK_ROWS, tile), _round_up(rows, tile))
    num_blocks = pl.cdiv(rows, block_rows)

    # Generation-aware shard count (2 only on multi-TC v7x), clamped to block count
    # so tiny inputs never issue a clamped duplicate-block DMA.
    num_shards = max(1, min(_num_tensorcores(), num_blocks))
    steps_per_shard = pl.cdiv(num_blocks, num_shards)

    def in_map(p, k):
        # Clamp so the DMA never starts past the array; overhanging shard steps are
        # fully masked inside the kernel and contribute zero.
        return (jnp.minimum(p * steps_per_shard + k, num_blocks - 1), 0)

    kernel = functools.partial(
        _mse_kernel,
        block_rows=block_rows,
        steps_per_shard=steps_per_shard,
        rows_valid=rows,
    )

    bytes_accessed = (x2.size * x2.dtype.itemsize
                      + t2.size * t2.dtype.itemsize
                      + num_shards * _SUB * _LANE * 4)

    partials = pl.pallas_call(
        kernel,
        out_shape=jax.ShapeDtypeStruct((num_shards, _SUB, _LANE), jnp.float32),
        grid_spec=pltpu.PrefetchScalarGridSpec(
            num_scalar_prefetch=0,
            grid=(num_shards, steps_per_shard),
            in_specs=[
                pl.BlockSpec((block_rows, _LANE), in_map),
                pl.BlockSpec((block_rows, _LANE), in_map),
            ],
            out_specs=pl.BlockSpec((1, _SUB, _LANE), lambda p, k: (p, 0, 0)),
        ),
        compiler_params=pltpu.CompilerParams(
            dimension_semantics=("parallel", "arbitrary"),
            vmem_limit_bytes=_VMEM_LIMIT_BYTES,
        ),
        cost_estimate=pl.CostEstimate(
            flops=3 * n, transcendentals=0, bytes_accessed=bytes_accessed),
    )(x2, t2)

    # Final tiny cross-lane reduce + mean on a (num_shards, 8, 128) array.
    return jnp.sum(partials) / jnp.float32(n)


class ContentLoss:
    """JAX/Pallas port of the PyTorch ContentLoss module."""

    def __init__(self, target):
        # .detach() equivalent: stop_gradient (no-op on concrete arrays).
        target = jax.lax.stop_gradient(jnp.asarray(target))
        self.target = target
        self._n = target.size
        # Target is static: pad/reshape to the lane-major (rows, 128) view exactly once.
        self._t2 = _to_lane_major(target)
        self.loss = None

    def __call__(self, x):
        assert x.shape == self.target.shape, "input and target must have the same shape"
        x2 = _to_lane_major(x)
        # TODO(synk): self.loss is a Python side effect; it won't survive jit-ing
        # __call__ as a whole (same caveat as the stateful PyTorch module).
        self.loss = _mse_loss_2d(x2, self._t2, self._n)
        return x   # identity pass-through, exactly like the PyTorch module


if __name__ == "__main__":
    key = jax.random.PRNGKey(0)
    k1, k2, k3, k4, k5, k6 = jax.random.split(key, 6)

    # --- main test: small NCHW feature map, f32 ---
    shape = (2, 4, 16, 16)
    target = jax.random.normal(k1, shape, dtype=jnp.float32)
    x = jax.random.normal(k2, shape, dtype=jnp.float32)

    module = ContentLoss(target)
    out = module(x)

    out = jax.block_until_ready(out)
    loss = jax.block_until_ready(module.loss)

    ref = jnp.mean((x - target) ** 2)
    assert out.shape == x.shape and out.dtype == x.dtype
    assert jnp.allclose(loss, ref, rtol=1e-5, atol=1e-6), (loss, ref)

    # --- ragged test: row count not a multiple of 8 (exercises the masked cold path) ---
    shape2 = (2, 3, 16, 16)  # 1536 elements -> 12 rows of 128 lanes
    t2 = jax.random.normal(k3, shape2, dtype=jnp.float32)
    x2 = jax.random.normal(k4, shape2, dtype=jnp.float32)
    m2 = ContentLoss(t2)
    _ = m2(x2)
    loss2 = jax.block_until_ready(m2.loss)
    ref2 = jnp.mean((x2 - t2) ** 2)
    assert jnp.allclose(loss2, ref2, rtol=1e-5, atol=1e-6), (loss2, ref2)

    # --- bf16 test: inputs stream at native width, cast to f32 in-kernel ---
    t3 = target.astype(jnp.bfloat16)
    x3 = x.astype(jnp.bfloat16)
    m3 = ContentLoss(t3)
    _ = m3(x3)
    loss3 = jax.block_until_ready(m3.loss)
    ref3 = jnp.mean((x3.astype(jnp.float32) - t3.astype(jnp.float32)) ** 2)
    assert jnp.allclose(loss3, ref3, rtol=1e-5, atol=1e-6), (loss3, ref3)

    # --- multi-block test: >1 grid step, partial last block (hot + cold paths) ---
    shape4 = (3, 8, 256, 256)  # 1,572,864 elements -> 12288 rows -> 2 blocks of 8192
    t4 = jax.random.normal(k5, shape4, dtype=jnp.float32)
    x4 = jax.random.normal(k6, shape4, dtype=jnp.float32)
    m4 = ContentLoss(t4)
    _ = m4(x4)
    loss4 = jax.block_until_ready(m4.loss)
    ref4 = jnp.mean((x4 - t4) ** 2)
    assert jnp.allclose(loss4, ref4, rtol=1e-5, atol=1e-6), (loss4, ref4)

    print("KERNEL_OK")
</pallas_src>

<mosaic_0001>
module attributes {stable_mosaic.version = 11 : i64} {
  func.func @_mse_kernel(%arg0: i32, %arg1: i32, %arg2: memref<16x128xf32, #tpu.memory_space<vmem>>, %arg3: memref<16x128xf32, #tpu.memory_space<vmem>>, %arg4: memref<1x8x128xf32, #tpu.memory_space<vmem>>) attributes {dimension_semantics = [#tpu.dimension_semantics<parallel>, #tpu.dimension_semantics<arbitrary>], iteration_bounds = array<i64: 1, 1>, scalar_prefetch = 0 : i64, scratch_operands = 0 : i64, tpu.core_type = #tpu.core_type<tc>, window_params = [{transform_indices = @transform_0, window_bounds = array<i64: 16, 128>}, {transform_indices = @transform_1, window_bounds = array<i64: 16, 128>}, {transform_indices = @transform_2, window_bounds = array<i64: 1, 8, 128>}]} {
    %c0_i32 = arith.constant 0 : i32
    %0 = arith.cmpi eq, %arg1, %c0_i32 : i32
    %1 = arith.extui %0 : i1 to i32
    %c0_i32_0 = arith.constant 0 : i32
    %2 = arith.cmpi ne, %1, %c0_i32_0 : i32
    scf.if %2 {
      %cst = arith.constant 0.000000e+00 : f32
      %17 = vector.broadcast %cst : f32 to vector<1x8x128xf32>
      %c0_10 = arith.constant 0 : index
      %c0_11 = arith.constant 0 : index
      %c0_12 = arith.constant 0 : index
      %18 = vector.load %arg4[%c0_10, %c0_11, %c0_12] : memref<1x8x128xf32, #tpu.memory_space<vmem>>, vector<1x8x128xf32>
      tpu.vector_store %arg4[%c0_10, %c0_11, %c0_12], %17 {strides = array<i32>} : memref<1x8x128xf32, #tpu.memory_space<vmem>>, vector<1x8x128xf32>,
    } else {
    }
    %c1_i32 = arith.constant 1 : i32
    %3 = arith.muli %arg0, %c1_i32 : i32
    %4 = arith.addi %3, %arg1 : i32
    %c16_i32 = arith.constant 16 : i32
    %5 = arith.muli %4, %c16_i32 : i32
    %c0 = arith.constant 0 : index
    %c0_1 = arith.constant 0 : index
    %6 = vector.load %arg2[%c0, %c0_1] : memref<16x128xf32, #tpu.memory_space<vmem>>, vector<16x128xf32>
    %c0_2 = arith.constant 0 : index
    %c0_3 = arith.constant 0 : index
    %7 = vector.load %arg3[%c0_2, %c0_3] : memref<16x128xf32, #tpu.memory_space<vmem>>, vector<16x128xf32>
    %8 = arith.subf %6, %7 : vector<16x128xf32>
    %c16_i32_4 = arith.constant 16 : i32
    %9 = arith.addi %5, %c16_i32_4 : i32
    %c16_i32_5 = arith.constant 16 : i32
    %10 = arith.cmpi sle, %9, %c16_i32_5 : i32
    %11 = arith.extui %10 : i1 to i32
    %c0_i32_6 = arith.constant 0 : i32
    %12 = arith.cmpi ne, %11, %c0_i32_6 : i32
    scf.if %12 {
      %c0_10 = arith.constant 0 : index
      %c0_11 = arith.constant 0 : index
      %c0_12 = arith.constant 0 : index
      %17 = vector.load %arg4[%c0_10, %c0_11, %c0_12] : memref<1x8x128xf32, #tpu.memory_space<vmem>>, vector<1x8x128xf32>
      %18 = vector.shape_cast %17 : vector<1x8x128xf32> to vector<8x128xf32>
      %19 = arith.mulf %8, %8 : vector<16x128xf32>
      %20 = vector.shape_cast %19 : vector<16x128xf32> to vector<2x8x128xf32>
      %cst = arith.constant dense<0.000000e+00> : vector<8x128xf32>
      %21 = vector.multi_reduction <add>, %20, %cst [0] : vector<2x8x128xf32> to vector<8x128xf32>
      %22 = arith.addf %18, %21 : vector<8x128xf32>
      %c0_13 = arith.constant 0 : index
      %c0_14 = arith.constant 0 : index
      %c0_15 = arith.constant 0 : index
      %23 = vector.load %arg4[%c0_13, %c0_14, %c0_15] : memref<1x8x128xf32, #tpu.memory_space<vmem>>, vector<1x8x128xf32>
      %24 = vector.shape_cast %23 : vector<1x8x128xf32> to vector<8x128xf32>
      %25 = vector.shape_cast %22 : vector<8x128xf32> to vector<1x8x128xf32>
      tpu.vector_store %arg4[%c0_13, %c0_14, %c0_15], %25 {strides = array<i32>} : memref<1x8x128xf32, #tpu.memory_space<vmem>>, vector<1x8x128xf32>,
    } else {
    }
    %c16_i32_7 = arith.constant 16 : i32
    %13 = arith.addi %5, %c16_i32_7 : i32
    %c16_i32_8 = arith.constant 16 : i32
    %14 = arith.cmpi sgt, %13, %c16_i32_8 : i32
    %15 = arith.extui %14 : i1 to i32
    %c0_i32_9 = arith.constant 0 : i32
    %16 = arith.cmpi ne, %15, %c0_i32_9 : i32
    scf.if %16 {
      %c16_i32_10 = arith.constant 16 : i32
      %17 = arith.subi %c16_i32_10, %5 : i32
      %18 = tpu.iota {dimensions = array<i32: 0>} : vector<16x128xi32>
      %19 = vector.broadcast %17 : i32 to vector<16x128xi32>
      %20 = arith.cmpi slt, %18, %19 : vector<16x128xi32>
      %21 = arith.mulf %8, %8 : vector<16x128xf32>
      %cst = arith.constant 0.000000e+00 : f32
      %22 = vector.broadcast %cst : f32 to vector<16x128xf32>
      %23 = arith.select %20, %21, %22 : vector<16x128xi1>, vector<16x128xf32>
      %c0_11 = arith.constant 0 : index
      %c0_12 = arith.constant 0 : index
      %c0_13 = arith.constant 0 : index
      %24 = vector.load %arg4[%c0_11, %c0_12, %c0_13] : memref<1x8x128xf32, #tpu.memory_space<vmem>>, vector<1x8x128xf32>
      %25 = vector.shape_cast %24 : vector<1x8x128xf32> to vector<8x128xf32>
      %26 = vector.shape_cast %23 : vector<16x128xf32> to vector<2x8x128xf32>
      %cst_14 = arith.constant dense<0.000000e+00> : vector<8x128xf32>
      %27 = vector.multi_reduction <add>, %26, %cst_14 [0] : vector<2x8x128xf32> to vector<8x128xf32>
      %28 = arith.addf %25, %27 : vector<8x128xf32>
      %c0_15 = arith.constant 0 : index
      %c0_16 = arith.constant 0 : index
      %c0_17 = arith.constant 0 : index
      %29 = vector.load %arg4[%c0_15, %c0_16, %c0_17] : memref<1x8x128xf32, #tpu.memory_space<vmem>>, vector<1x8x128xf32>
      %30 = vector.shape_cast %29 : vector<1x8x128xf32> to vector<8x128xf32>
      %31 = vector.shape_cast %28 : vector<8x128xf32> to vector<1x8x128xf32>
      tpu.vector_store %arg4[%c0_15, %c0_16, %c0_17], %31 {strides = array<i32>} : memref<1x8x128xf32, #tpu.memory_space<vmem>>, vector<1x8x128xf32>,
    } else {
    }
    return
  }
  func.func @transform_0(%arg0: i32, %arg1: i32) -> (i32, i32) {
    %c1_i32 = arith.constant 1 : i32
    %0 = arith.muli %arg0, %c1_i32 : i32
    %1 = arith.addi %0, %arg1 : i32
    %c0_i32 = arith.constant 0 : i32
    %2 = arith.minsi %1, %c0_i32 : i32
    %c0_i32_0 = arith.constant 0 : i32
    %c0_i32_1 = arith.constant 0 : i32
    return %2, %c0_i32_0 : i32, i32
  }
  func.func @transform_1(%arg0: i32, %arg1: i32) -> (i32, i32) {
    %c1_i32 = arith.constant 1 : i32
    %0 = arith.muli %arg0, %c1_i32 : i32
    %1 = arith.addi %0, %arg1 : i32
    %c0_i32 = arith.constant 0 : i32
    %2 = arith.minsi %1, %c0_i32 : i32
    %c0_i32_0 = arith.constant 0 : i32
    %c0_i32_1 = arith.constant 0 : i32
    return %2, %c0_i32_0 : i32, i32
  }
  func.func @transform_2(%arg0: i32, %arg1: i32) -> (i32, i32, i32) {
    %c0_i32 = arith.constant 0 : i32
    %c0_i32_0 = arith.constant 0 : i32
    %c0_i32_1 = arith.constant 0 : i32
    return %arg0, %c0_i32, %c0_i32_0 : i32, i32, i32
  }
}

</mosaic_0001>

<llo_original>
// kernel: tpu_custom_call.1
$region0: #{tpu_custom_call.1}
  #allocation0 [shape = 'u32[]', space=smem, size = 0x4, offset = 0x4, fixed_abs, tag = 'smem constant byte address 0x4 - core index']
  #allocation1 [shape = 'u32[144,128]{1,0:T(1,128)}', space=vmem, size = 0x12000, scoped, tag = 'internal scratch']
  %s0 = inlined_call_operand.hbm [shape: f32[16,128], index: 0, kind: input, shape index: {}]
  %s1 = inlined_call_operand.hbm [shape: f32[16,128], index: 1, kind: input, shape index: {}]
  %s2 = inlined_call_operand.hbm [shape: f32[1,8,128], index: 2, kind: output, shape index: {}]
  %s3 = sld [smem:[#allocation0]]
  $region38: #{tpu_custom_call.1} parent=0
    _
  %s5 = ssub.s32 1, %s3
  %s6 = scalar_select 0, %s5, %s3
  $region1: #{tpu_custom_call.1} parent=0
    #allocation2 [shape = 'u8[8192]{0}', space=vmem, size = 0x2000, scoped, tag = 'input window, operand 0, single buffered']
    #allocation3 [shape = 's32[1]{0}', space=sflag, size = 0x4, scoped, tag = 'scoped memory for tpu_custom_call.1']
    #allocation4 [shape = 's32[1]{0}', space=sflag, size = 0x4, scoped, tag = 'scoped memory for tpu_custom_call.1']
    #allocation5 [shape = 'u8[8192]{0}', space=vmem, size = 0x2000, scoped, tag = 'input window, operand 1, single buffered']
    #allocation6 [shape = 's32[1]{0}', space=sflag, size = 0x4, scoped, tag = 'scoped memory for tpu_custom_call.1']
    #allocation7 [shape = 'u8[4096]{0}', space=vmem, size = 0x1000, scoped, tag = 'output window, operand 0, single buffered']
    %7 = vsyncpa [#allocation3], 0
    %8 = vsyncpa [#allocation6], 0
    %9 = vsyncpa [#allocation4], 0
    // Predicated region
    $region2: #{tpu_custom_call.1} parent=1 // pred_check
      _
    $region3: #{tpu_custom_call.1} parent=1 // pred_check_branch
      %11 = sbr.rel (0) target = $region5
    $region4: #{tpu_custom_call.1} parent=1 // pred_region
      %s12 = sadd.s32 0, 0
      %p13 = scmp.lt.s32.totalorder %s12, 0
      %s14 = scalar_select %p13, %s12, 0
      %s15 = smul.u32 2, %s14
      %s17 = ssub.s32 256, 256
      %18 = vsyncadd [#allocation3], %s17
      %s19 = smul.addr %s15, 128
      %s20 = scalar_lea.hbm %s0, %s19
      %s21 = sshll.u32 [#allocation2], 4
      %s22 = int_to_ptr.vmem [resolvable:$true] %s21
      %27 = dma.hbm_to_vmem [thread:$0]  %s20, 256, %s22, [#allocation3], 128, 128, 8
    $region5: #{tpu_custom_call.1} parent=1 // pred_fallthru
      _
    // Predicated region
    $region6: #{tpu_custom_call.1} parent=1 // pred_check
      _
    $region7: #{tpu_custom_call.1} parent=1 // pred_check_branch
      %29 = sbr.rel (0) target = $region9
    $region8: #{tpu_custom_call.1} parent=1 // pred_region
      %s30 = sadd.s32 0, 0
      %p31 = scmp.lt.s32.totalorder %s30, 0
      %s32 = scalar_select %p31, %s30, 0
      %s33 = smul.u32 2, %s32
      %s35 = ssub.s32 256, 256
      %36 = vsyncadd [#allocation6], %s35
      %s37 = smul.addr %s33, 128
      %s38 = scalar_lea.hbm %s1, %s37
      %s39 = sshll.u32 [#allocation5], 4
      %s40 = int_to_ptr.vmem [resolvable:$true] %s39
      %45 = dma.hbm_to_vmem [thread:$0]  %s38, 256, %s40, [#allocation6], 128, 128, 8
    $region9: #{tpu_custom_call.1} parent=1 // pred_fallthru
      _
    // Predicated region
    $region10: #{tpu_custom_call.1} parent=1 // pred_check
      _
    $region11: #{tpu_custom_call.1} parent=1 // pred_check_branch
      %47 = sbr.rel (0) target = $region13
    $region12: #{tpu_custom_call.1} parent=1 // pred_region
      %48 = dma.done [#allocation3], 256
    $region13: #{tpu_custom_call.1} parent=1 // pred_fallthru
      _
    // Predicated region
    $region14: #{tpu_custom_call.1} parent=1 // pred_check
      _
    $region15: #{tpu_custom_call.1} parent=1 // pred_check_branch
      %50 = sbr.rel (0) target = $region17
    $region16: #{tpu_custom_call.1} parent=1 // pred_region
      %51 = dma.done [#allocation6], 256
    $region17: #{tpu_custom_call.1} parent=1 // pred_fallthru
      _
    %s52 = sadd.s32 0, 0
    %p53 = scmp.lt.s32.totalorder %s52, 0
    %s54 = scalar_select %p53, %s52, 0
    %s55 = smul.u32 2, %s54
    %s56 = sadd.s32 0, 0
    %p57 = scmp.lt.s32.totalorder %s56, 0
    %s58 = scalar_select %p57, %s56, 0
    %s59 = smul.u32 2, %s58
    %p60 = scmp.eq.s32.totalorder 0, 0
    // Predicated region
    $region18: #{tpu_custom_call.1} parent=1 // pred_check
      %p61 = pneg %p60
    $region19: #{tpu_custom_call.1} parent=1 // pred_check_branch
      %63 = sbr.rel (%p61) target = $region21
    $region20: #{tpu_custom_call.1} parent=1 // pred_region
      %64 = vst [vmem:[#allocation7] sm:$0xff] 0.0
    $region21: #{tpu_custom_call.1} parent=1 // pred_fallthru
      _
    %s65 = sadd.s32 0, 0
    %s66 = smul.u32 %s65, 16
    %v67 = vld [vmem:[#allocation2] sm:$0xff]
    %v68 = vld [vmem:[#allocation2 + $0x8] sm:$0xff]
    %v69 = vld [vmem:[#allocation5] sm:$0xff]
    %v70 = vld [vmem:[#allocation5 + $0x8] sm:$0xff]
    %v71 = vsub.f32 %v67, %v69
    %v72 = vsub.f32 %v68, %v70
    %s73 = sadd.s32 %s66, 16
    %p74 = scmp.le.s32.totalorder %s73, 16
    // Predicated region
    $region22: #{tpu_custom_call.1} parent=1 // pred_check
      %p75 = pneg %p74
    $region23: #{tpu_custom_call.1} parent=1 // pred_check_branch
      %77 = sbr.rel (%p75) target = $region25
    $region24: #{tpu_custom_call.1} parent=1 // pred_region
      %v78 = vld [vmem:[#allocation7] sm:$0xff]
      %v79 = vmul.f32 %v71, %v71
      %v80 = vmul.f32 %v72, %v72
      %v81 = vadd.f32 %v79, %v80
      %v82 = vadd.f32 %v78, %v81
      %83 = vst [vmem:[#allocation7] sm:$0xff] %v82
    $region25: #{tpu_custom_call.1} parent=1 // pred_fallthru
      _
    %p84 = scmp.gt.s32.totalorder %s73, 16
    // Predicated region
    $region26: #{tpu_custom_call.1} parent=1 // pred_check
      %p85 = pneg %p84
    $region27: #{tpu_custom_call.1} parent=1 // pred_check_branch
      %87 = sbr.rel (%p85) target = $region29
    $region28: #{tpu_custom_call.1} parent=1 // pred_region
      %s88 = ssub.s32 16, %s66
      %v89 = vlaneseq
      %v90 = vshrl.u32 %v89, 7
      %v91 = vadd.s32 %v90, 8
      %v92 = vstv %s88
      %vm93 = vcmp.lt.s32.totalorder %v90, %v92
      %vm94 = vcmp.lt.s32.totalorder %v91, %v92
      %v95 = vmul.f32 %v71, %v71
      %v96 = vmul.f32 %v72, %v72
      %v97 = vsel %vm93, %v95, 0.0
      %v98 = vsel %vm94, %v96, 0.0
      %v99 = vld [vmem:[#allocation7] sm:$0xff]
      %v100 = vadd.f32 %v97, %v98
      %v101 = vadd.f32 %v99, %v100
      %102 = vst [vmem:[#allocation7] sm:$0xff] %v101
    $region29: #{tpu_custom_call.1} parent=1 // pred_fallthru
      _
    // Predicated region
    $region30: #{tpu_custom_call.1} parent=1 // pred_check
      _
    $region31: #{tpu_custom_call.1} parent=1 // pred_check_branch
      %104 = sbr.rel (0) target = $region33
    $region32: #{tpu_custom_call.1} parent=1 // pred_region
      %s106 = ssub.s32 128, 128
      %107 = vsyncadd [#allocation4], %s106
      %s109 = sshll.u32 [#allocation7], 4
      %s110 = int_to_ptr.vmem [resolvable:$true] %s109
      %112 = dma.vmem_to_hbm [thread:$0]  %s110, 128, %s2, [#allocation4]
    $region33: #{tpu_custom_call.1} parent=1 // pred_fallthru
      _
    // Predicated region
    $region34: #{tpu_custom_call.1} parent=1 // pred_check
      _
    $region35: #{tpu_custom_call.1} parent=1 // pred_check_branch
      %114 = sbr.rel (0) target = $region37
    $region36: #{tpu_custom_call.1} parent=1 // pred_region
      %115 = dma.done [#allocation4], 128
    $region37: #{tpu_custom_call.1} parent=1 // pred_fallthru
      _
    %116 = vsyncpa [#allocation3], 1
    %117 = vsyncpa [#allocation6], 1
    %118 = vsyncpa [#allocation4], 1

</llo_original>
